<compile_context>
chip_gen: v6e
topology: v6e:2x2x1
jax: 0.10.0
libtpu: 0.0.40
codegen_flags: <defaults>
</compile_context>

<pallas_src>
import functools

import jax
import jax.numpy as jnp
from jax.experimental import pallas as pl
from jax.experimental.pallas import tpu as pltpu

_LANES = 128
_TARGET_BLOCK_BYTES = 2 * 1024 * 1024   # ~2 MiB per block (~86% HBM roofline)
_FULL_BLOCK_MAX_BYTES = 4 * 1024 * 1024  # ragged fallback: whole array in one block


def _cdiv(a, b):
    return -(-a // b)


def _sublane_tile(dtype):
    # Packed sublane tile: 8 rows for 4-byte dtypes, 16 for 2-byte, 32 for 1-byte.
    return max(8, 32 // jnp.dtype(dtype).itemsize)


def _noise_kernel_tpu(seed_ref, x_ref, o_ref, *, sigma):
    # Mix the user seed with the grid position so every block draws fresh,
    # uncorrelated noise.
    pltpu.prng_seed(seed_ref[0], pl.program_id(0))
    x = x_ref[...].astype(jnp.float32)
    # TODO(synk): on v7x, if profiling shows the single EUP slot saturated by
    # stateful_normal (HBM no longer the ceiling there), swap in a VPU-only
    # Irwin-Hall approximation built from pltpu.prng_random_bits.
    noise = pltpu.stateful_normal(x_ref.shape, jnp.float32)
    # Fused as x * (1 + sigma*noise): one fewer VALU multiply than x + x*s*n.
    o_ref[...] = (x * (1.0 + sigma * noise)).astype(o_ref.dtype)


def _noise_kernel_generic(x_ref, n_ref, o_ref, *, sigma):
    x = x_ref[...].astype(jnp.float32)
    noise = n_ref[...].astype(jnp.float32)
    o_ref[...] = (x * (1.0 + sigma * noise)).astype(o_ref.dtype)


def _choose_layout(n, dtype):
    """Pick (x2_shape, block_shape, grid, pad_tail) for the flat array."""
    itemsize = jnp.dtype(dtype).itemsize
    sub = _sublane_tile(dtype)
    target_rows = max(sub, (_TARGET_BLOCK_BYTES // (_LANES * itemsize)) // sub * sub)

    if n % _LANES == 0:
        # Lane-dense 2-D metadata-only reshape: no pad, no extra HBM pass.
        rows = n // _LANES
        nblk = max(1, _cdiv(rows, target_rows))
        if rows > sub:
            nblk = max(nblk, 2)          # >=2 steps so both v7x TCs get work
        if nblk > 1 and nblk % 2:
            nblk += 1                    # keep the step count even
        block_rows = max(sub, _cdiv(_cdiv(rows, nblk), sub) * sub)
        grid = (_cdiv(rows, block_rows),)   # cdiv grid masks the partial tail
        return (rows, _LANES), (block_rows, _LANES), grid, 0

    if n * itemsize <= _FULL_BLOCK_MAX_BYTES:
        # Ragged but small: single full-array block (full-extent block shape
        # bypasses the (8,128) rule) -- still no wrapper-side pad/slice.
        return (1, n), (1, n), (1,), 0

    # TODO(synk): large ragged arrays still take a pad+slice path (two extra
    # HBM passes); handle the <128-element tail with an in-kernel masked store
    # if this case ever shows up in profiles.
    rows = _cdiv(n, _LANES)
    rows_pad = _cdiv(rows, sub) * sub
    pad_tail = rows_pad * _LANES - n
    return (rows_pad, _LANES), (target_rows, _LANES), (_cdiv(rows_pad, target_rows),), pad_tail


def gaussian_noise(x, *, sigma=0.1, seed=0, training=True,
                   is_relative_detach=True):
    """JAX/Pallas equivalent of GaussianNoise.forward (forward value only)."""
    del is_relative_detach  # forward value identical; gradient-only flag
    if (not training) or sigma == 0:
        return x

    orig_shape = x.shape
    orig_dtype = x.dtype
    n = x.size

    x2_shape, blk, grid, pad_tail = _choose_layout(n, orig_dtype)

    xf = x.reshape(-1)
    if pad_tail:
        xf = jnp.pad(xf, (0, pad_tail))
    x2 = xf.reshape(x2_shape)

    out_sds = jax.ShapeDtypeStruct(x2_shape, orig_dtype)
    cparams = pltpu.CompilerParams(dimension_semantics=("parallel",))

    if jax.default_backend() == "tpu":
        seed_arr = jnp.asarray([seed], dtype=jnp.int32)
        out2 = pl.pallas_call(
            functools.partial(_noise_kernel_tpu, sigma=float(sigma)),
            out_shape=out_sds,
            grid_spec=pltpu.PrefetchScalarGridSpec(
                num_scalar_prefetch=1,
                grid=grid,
                in_specs=[pl.BlockSpec(blk, lambda i, seed_ref: (i, 0))],
                out_specs=pl.BlockSpec(blk, lambda i, seed_ref: (i, 0)),
            ),
            compiler_params=cparams,
        )(seed_arr, x2)
    else:
        # Non-TPU / interpret fallback: TPU HW-PRNG primitives have no lowering
        # here, so draw the noise with jax.random and fuse only the scale+add.
        noise_dtype = (orig_dtype if jnp.issubdtype(orig_dtype, jnp.floating)
                       else jnp.float32)
        noise = jax.random.normal(jax.random.PRNGKey(seed), x2_shape,
                                  dtype=noise_dtype)
        out2 = pl.pallas_call(
            functools.partial(_noise_kernel_generic, sigma=float(sigma)),
            out_shape=out_sds,
            grid=grid,
            in_specs=[pl.BlockSpec(blk, lambda i: (i, 0)),
                      pl.BlockSpec(blk, lambda i: (i, 0))],
            out_specs=pl.BlockSpec(blk, lambda i: (i, 0)),
            compiler_params=cparams,
        )(x2, noise)

    if pad_tail:
        out2 = out2.reshape(-1)[:n]
    return out2.reshape(orig_shape)


if __name__ == "__main__":
    key = jax.random.PRNGKey(0)
    # NCHW, consistent with the conv-style activations this module sits between.
    x = jax.random.normal(key, (2, 4, 16, 16), dtype=jnp.float32)
    sigma = 0.1

    y_train = jax.block_until_ready(
        gaussian_noise(x, sigma=sigma, seed=42, training=True))
    y_eval = jax.block_until_ready(
        gaussian_noise(x, sigma=sigma, seed=42, training=False))

    assert y_train.shape == x.shape and y_train.dtype == x.dtype
    assert bool(jnp.all(y_eval == x))                      # eval mode: identity
    assert bool(jnp.all(jnp.isfinite(y_train)))
    assert float(jnp.max(jnp.abs(y_train - x))) > 0.0      # noise was applied

    # Relative noise check: (y/x - 1)/sigma should look ~N(0, 1) where |x| is
    # not tiny (loose band -- it is random noise, not a bit-exact quantity).
    mask = jnp.abs(x) > 0.1
    z = jnp.where(mask, (y_train - x) / (sigma * x), 0.0)
    z_std = jnp.sqrt(jnp.sum(z * z) / jnp.sum(mask))
    assert 0.7 < float(z_std) < 1.4, float(z_std)

    # bf16 smoke test (exercises dtype-aware packed-sublane block rounding).
    xb = jax.random.normal(jax.random.PRNGKey(1), (2, 4, 16, 16),
                           dtype=jnp.bfloat16)
    yb = jax.block_until_ready(
        gaussian_noise(xb, sigma=sigma, seed=7, training=True))
    assert yb.shape == xb.shape and yb.dtype == xb.dtype
    assert bool(jnp.all(jnp.isfinite(yb.astype(jnp.float32))))
    assert float(jnp.max(jnp.abs(
        (yb - xb).astype(jnp.float32)))) > 0.0

    print("KERNEL_OK")
</pallas_src>

<mosaic_0001>
module attributes {stable_mosaic.version = 11 : i64} {
  func.func @_noise_kernel_generic(%arg0: i32, %arg1: memref<8x128xf32, #tpu.memory_space<vmem>>, %arg2: memref<8x128xf32, #tpu.memory_space<vmem>>, %arg3: memref<8x128xf32, #tpu.memory_space<vmem>>) attributes {dimension_semantics = [#tpu.dimension_semantics<parallel>], iteration_bounds = array<i64: 2>, scalar_prefetch = 0 : i64, scratch_operands = 0 : i64, tpu.core_type = #tpu.core_type<tc>, window_params = [{transform_indices = @transform_0, window_bounds = array<i64: 8, 128>}, {transform_indices = @transform_1, window_bounds = array<i64: 8, 128>}, {transform_indices = @transform_2, window_bounds = array<i64: 8, 128>}]} {
    %c0 = arith.constant 0 : index
    %c0_0 = arith.constant 0 : index
    %0 = vector.load %arg1[%c0, %c0_0] : memref<8x128xf32, #tpu.memory_space<vmem>>, vector<8x128xf32>
    %c0_1 = arith.constant 0 : index
    %c0_2 = arith.constant 0 : index
    %1 = vector.load %arg2[%c0_1, %c0_2] : memref<8x128xf32, #tpu.memory_space<vmem>>, vector<8x128xf32>
    %cst = arith.constant 1.000000e-01 : f32
    %2 = vector.broadcast %cst : f32 to vector<8x128xf32>
    %3 = arith.mulf %2, %1 : vector<8x128xf32>
    %cst_3 = arith.constant 1.000000e+00 : f32
    %4 = vector.broadcast %cst_3 : f32 to vector<8x128xf32>
    %5 = arith.addf %4, %3 : vector<8x128xf32>
    %6 = arith.mulf %0, %5 : vector<8x128xf32>
    %c0_4 = arith.constant 0 : index
    %c0_5 = arith.constant 0 : index
    %7 = vector.load %arg3[%c0_4, %c0_5] : memref<8x128xf32, #tpu.memory_space<vmem>>, vector<8x128xf32>
    tpu.vector_store %arg3[%c0_4, %c0_5], %6 {strides = array<i32>} : memref<8x128xf32, #tpu.memory_space<vmem>>, vector<8x128xf32>,
    return
  }
  func.func @transform_0(%arg0: i32) -> (i32, i32) {
    %c0_i32 = arith.constant 0 : i32
    %c0_i32_0 = arith.constant 0 : i32
    return %arg0, %c0_i32 : i32, i32
  }
  func.func @transform_1(%arg0: i32) -> (i32, i32) {
    %c0_i32 = arith.constant 0 : i32
    %c0_i32_0 = arith.constant 0 : i32
    return %arg0, %c0_i32 : i32, i32
  }
  func.func @transform_2(%arg0: i32) -> (i32, i32) {
    %c0_i32 = arith.constant 0 : i32
    %c0_i32_0 = arith.constant 0 : i32
    return %arg0, %c0_i32 : i32, i32
  }
}

</mosaic_0001>

<llo_original>
// kernel: tpu_custom_call.1
$region0: #{tpu_custom_call.1}
  #allocation0 [shape = 'u32[]', space=smem, size = 0x4, offset = 0x4, fixed_abs, tag = 'smem constant byte address 0x4 - core index']
  #allocation1 [shape = 'u32[144,128]{1,0:T(1,128)}', space=vmem, size = 0x12000, scoped, tag = 'internal scratch']
  %s0 = inlined_call_operand.hbm [shape: f32[16,128], index: 0, kind: input, shape index: {}]
  %s1 = inlined_call_operand.hbm [shape: f32[16,128], index: 1, kind: input, shape index: {}]
  %s2 = inlined_call_operand.hbm [shape: f32[16,128], index: 2, kind: output, shape index: {}]
  %s3 = sld [smem:[#allocation0]]
  $region49: #{tpu_custom_call.1} parent=0
    _
  %s5 = ssub.s32 1, %s3
  %s6 = scalar_select 0, %s5, %s3
  $region1: #{tpu_custom_call.1} parent=0
    #allocation2 [shape = 'u8[8192]{0}', space=vmem, size = 0x2000, scoped, tag = 'input window, operand 0']
    #allocation3 [shape = 's32[2]{0}', space=sflag, size = 0x8, scoped, tag = 'scoped memory for tpu_custom_call.1']
    #allocation4 [shape = 's32[2]{0}', space=sflag, size = 0x8, scoped, tag = 'scoped memory for tpu_custom_call.1']
    #allocation5 [shape = 'u8[8192]{0}', space=vmem, size = 0x2000, scoped, tag = 'input window, operand 1']
    #allocation6 [shape = 's32[2]{0}', space=sflag, size = 0x8, scoped, tag = 'scoped memory for tpu_custom_call.1']
    #allocation7 [shape = 'u8[8192]{0}', space=vmem, size = 0x2000, scoped, tag = 'output window, operand 0']
    %7 = vsyncpa [#allocation3], 0
    %s8 = scalar_lea.sflag [#allocation3], 1
    %9 = vsyncpa %s8, 0
    %10 = vsyncpa [#allocation6], 0
    %s11 = scalar_lea.sflag [#allocation6], 1
    %12 = vsyncpa %s11, 0
    %13 = vsyncpa [#allocation4], 0
    %s14 = scalar_lea.sflag [#allocation4], 1
    %15 = vsyncpa %s14, 0
    loop: start=0, step=1, limit=4
    $region2: #{tpu_custom_call.1} parent=1 // loop_pre_header
      _
    $region3: #{tpu_custom_call.1} parent=1 // loop_header
      %s17 = sphi 0, %s21
      %p18 = scmp.ge.s32.totalorder %s17, 4
      %s27 = sphi 0, %s29
      %s30 = sphi 0, %s27
      %s31 = sphi 0, %s30
      %s47 = sphi 0, %s31
      %s53 = sphi 0, %s55
      %s56 = sphi 0, %s53
      %s57 = sphi 0, %s56
      %s73 = sphi 0, %s57
      %s79 = sphi 0, %s81
      %s82 = sphi 0, %s79
      %s83 = sphi 0, %s82
      %s99 = sphi 0, %s83
    $region4: #{tpu_custom_call.1} parent=1 // loop_header_branch
      %20 = sbr.rel (%p18) target = $region8
    $region5: #{tpu_custom_call.1} parent=1 // loop_body
      %s22 = ssub.s32 %s17, 1
      %s23 = ssub.s32 %s17, 2
      %s24 = sadd.s32 %s17, 1
      %s25 = ssub.s32 %s17, %s24
      %p26 = scmp.eq.s32.totalorder %s25, 0
      %s28 = sadd.s32 %s27, 1
      %s29 = scalar_select %p26, %s27, %s28
      %p32 = pneg %p26
      %p33 = scmp.eq.s32.totalorder %s17, 1
      %p34 = por %p32, %p33
      %p35 = scmp.ne.s32.totalorder %s27, %s30
      %p36 = scmp.eq.s32.totalorder %s17, 0
      %p37 = por %p35, %p36
      %p38 = scmp.ne.s32.totalorder %s27, %s30
      %p39 = scmp.eq.s32.totalorder %s22, 1
      %p40 = por %p38, %p39
      %p41 = scmp.ne.s32.totalorder %s30, %s31
      %p42 = scmp.eq.s32.totalorder %s22, 0
      %p43 = por %p41, %p42
      %p44 = scmp.ne.s32.totalorder %s30, %s31
      %p45 = scmp.eq.s32.totalorder %s23, 1
      %p46 = por %p44, %p45
      %p48 = scmp.ne.s32.totalorder %s31, %s47
      %p49 = scmp.eq.s32.totalorder %s23, 0
      %p50 = por %p48, %p49
      %s51 = ssub.s32 %s17, %s24
      %p52 = scmp.eq.s32.totalorder %s51, 0
      %s54 = sadd.s32 %s53, 1
      %s55 = scalar_select %p52, %s53, %s54
      %p58 = pneg %p52
      %p59 = scmp.eq.s32.totalorder %s17, 1
      %p60 = por %p58, %p59
      %p61 = scmp.ne.s32.totalorder %s53, %s56
      %p62 = scmp.eq.s32.totalorder %s17, 0
      %p63 = por %p61, %p62
      %p64 = scmp.ne.s32.totalorder %s53, %s56
      %p65 = scmp.eq.s32.totalorder %s22, 1
      %p66 = por %p64, %p65
      %p67 = scmp.ne.s32.totalorder %s56, %s57
      %p68 = scmp.eq.s32.totalorder %s22, 0
      %p69 = por %p67, %p68
      %p70 = scmp.ne.s32.totalorder %s56, %s57
      %p71 = scmp.eq.s32.totalorder %s23, 1
      %p72 = por %p70, %p71
      %p74 = scmp.ne.s32.totalorder %s57, %s73
      %p75 = scmp.eq.s32.totalorder %s23, 0
      %p76 = por %p74, %p75
      %s77 = ssub.s32 %s17, %s24
      %p78 = scmp.eq.s32.totalorder %s77, 0
      %s80 = sadd.s32 %s79, 1
      %s81 = scalar_select %p78, %s79, %s80
      %p84 = pneg %p78
      %p85 = scmp.eq.s32.totalorder %s17, 1
      %p86 = por %p84, %p85
      %p87 = scmp.ne.s32.totalorder %s79, %s82
      %p88 = scmp.eq.s32.totalorder %s17, 0
      %p89 = por %p87, %p88
      %p90 = scmp.ne.s32.totalorder %s79, %s82
      %p91 = scmp.eq.s32.totalorder %s22, 1
      %p92 = por %p90, %p91
      %p93 = scmp.ne.s32.totalorder %s82, %s83
      %p94 = scmp.eq.s32.totalorder %s22, 0
      %p95 = por %p93, %p94
      %p96 = scmp.ne.s32.totalorder %s82, %s83
      %p97 = scmp.eq.s32.totalorder %s23, 1
      %p98 = por %p96, %p97
      %p100 = scmp.ne.s32.totalorder %s83, %s99
      %p101 = scmp.eq.s32.totalorder %s23, 0
      %p102 = por %p100, %p101
      %p103 = scmp.le.s32.totalorder 1, %s17
      %p104 = scmp.lt.s32.totalorder %s17, 3
      %p105 = pnand %p103, %p104
      %p106 = pneg %p105
      // Predicated region
      $region9: #{tpu_custom_call.1} parent=5 // pred_check
        _
      $region10: #{tpu_custom_call.1} parent=5 // pred_check_branch
        %108 = sbr.rel (%p105) target = $region12
      $region11: #{tpu_custom_call.1} parent=5 // pred_region
        %s109 = ssub.s32 %s17, 1
      $region12: #{tpu_custom_call.1} parent=5 // pred_fallthru
        _
      %p110 = scmp.lt.s32.totalorder %s17, 2
      // Predicated region
      $region13: #{tpu_custom_call.1} parent=5 // pred_check
        %p111 = pneg %p110
      $region14: #{tpu_custom_call.1} parent=5 // pred_check_branch
        %113 = sbr.rel (%p111) target = $region16
      $region15: #{tpu_custom_call.1} parent=5 // pred_region
        // Predicated region
        $region17: #{tpu_custom_call.1} parent=15 // pred_check
          %p114 = pneg %p37
        $region18: #{tpu_custom_call.1} parent=15 // pred_check_branch
          %116 = sbr.rel (%p114) target = $region20
        $region19: #{tpu_custom_call.1} parent=15 // pred_region
          %s117 = sand.u32 %s27, 1
          %s118 = scalar_lea.sflag [#allocation3], %s117
          %s119 = sand.u32 %s27, 1
          %s120 = smul.addr %s119, 8
          %s121 = scalar_lea.vmem [#allocation2], %s120
          %s123 = ssub.s32 128, 128
          %124 = vsyncadd %s118, %s123
          %s125 = smul.addr %s17, 128
          %s126 = scalar_lea.hbm %s0, %s125
          %s128 = sshll.u32 %s121, 4
          %s129 = int_to_ptr.vmem [resolvable:$true] %s128
          %131 = dma.hbm_to_vmem [thread:$0]  %s126, 128, %s129, %s118
        $region20: #{tpu_custom_call.1} parent=15 // pred_fallthru
          _
        // Predicated region
        $region21: #{tpu_custom_call.1} parent=15 // pred_check
          %p132 = pneg %p63
        $region22: #{tpu_custom_call.1} parent=15 // pred_check_branch
          %134 = sbr.rel (%p132) target = $region24
        $region23: #{tpu_custom_call.1} parent=15 // pred_region
          %s135 = sand.u32 %s53, 1
          %s136 = scalar_lea.sflag [#allocation6], %s135
          %s137 = sand.u32 %s53, 1
          %s138 = smul.addr %s137, 8
          %s139 = scalar_lea.vmem [#allocation5], %s138
          %s141 = ssub.s32 128, 128
          %142 = vsyncadd %s136, %s141
          %s143 = smul.addr %s17, 128
          %s144 = scalar_lea.hbm %s1, %s143
          %s146 = sshll.u32 %s139, 4
          %s147 = int_to_ptr.vmem [resolvable:$true] %s146
          %149 = dma.hbm_to_vmem [thread:$0]  %s144, 128, %s147, %s136
        $region24: #{tpu_custom_call.1} parent=15 // pred_fallthru
          _
      $region16: #{tpu_custom_call.1} parent=5 // pred_fallthru
        _
      %p150 = scmp.le.s32.totalorder 1, %s17
      %p151 = scmp.lt.s32.totalorder %s17, 3
      %p152 = pnand %p150, %p151
      %p153 = pneg %p152
      // Predicated region
      $region25: #{tpu_custom_call.1} parent=5 // pred_check
        _
      $region26: #{tpu_custom_call.1} parent=5 // pred_check_branch
        %155 = sbr.rel (%p152) target = $region28
      $region27: #{tpu_custom_call.1} parent=5 // pred_region
        %s156 = ssub.s32 %s17, 1
        %s157 = sand.u32 %s30, 1
        %s158 = scalar_lea.sflag [#allocation3], %s157
        %s159 = sand.u32 %s30, 1
        %s160 = smul.addr %s159, 8
        %s161 = scalar_lea.vmem [#allocation2], %s160
        // Predicated region
        $region29: #{tpu_custom_call.1} parent=27 // pred_check
          %p162 = pneg %p43
        $region30: #{tpu_custom_call.1} parent=27 // pred_check_branch
          %164 = sbr.rel (%p162) target = $region32
        $region31: #{tpu_custom_call.1} parent=27 // pred_region
          %165 = dma.done %s158, 128
        $region32: #{tpu_custom_call.1} parent=27 // pred_fallthru
          _
        %s166 = sand.u32 %s56, 1
        %s167 = scalar_lea.sflag [#allocation6], %s166
        %s168 = sand.u32 %s56, 1
        %s169 = smul.addr %s168, 8
        %s170 = scalar_lea.vmem [#allocation5], %s169
        // Predicated region
        $region33: #{tpu_custom_call.1} parent=27 // pred_check
          %p171 = pneg %p69
        $region34: #{tpu_custom_call.1} parent=27 // pred_check_branch
          %173 = sbr.rel (%p171) target = $region36
        $region35: #{tpu_custom_call.1} parent=27 // pred_region
          %174 = dma.done %s167, 128
        $region36: #{tpu_custom_call.1} parent=27 // pred_fallthru
          _
        %s175 = sand.u32 %s30, 1
        %s176 = scalar_lea.sflag [#allocation3], %s175
        %s177 = sand.u32 %s30, 1
        %s178 = smul.addr %s177, 8
        %s179 = scalar_lea.vmem [#allocation2], %s178
        %p180 = pneg %p43
        %p181 = pneg %p40
        %s182 = sand.u32 %s56, 1
        %s183 = scalar_lea.sflag [#allocation6], %s182
        %s184 = sand.u32 %s56, 1
        %s185 = smul.addr %s184, 8
        %s186 = scalar_lea.vmem [#allocation5], %s185
        %p187 = pneg %p69
        %p188 = pneg %p66
        %p189 = pneg %p95
        %p190 = pneg %p92
        %s191 = sand.u32 %s82, 1
        %s192 = scalar_lea.sflag [#allocation4], %s191
        %s193 = sand.u32 %s82, 1
        %s194 = smul.addr %s193, 8
        %s195 = scalar_lea.vmem [#allocation7], %s194
        %v196 = vld [vmem:[%s161] sm:$0xff]
        %v197 = vld [vmem:[%s170] sm:$0xff]
        %v198 = vmul.f32 %v197, 0.1
        %v199 = vadd.f32 %v198, 1.0
        %v200 = vmul.f32 %v196, %v199
        %201 = vst [vmem:[%s195] sm:$0xff] %v200
        %s202 = sand.u32 %s82, 1
        %s203 = scalar_lea.sflag [#allocation4], %s202
        %s204 = sand.u32 %s82, 1
        %s205 = smul.addr %s204, 8
        %s206 = scalar_lea.vmem [#allocation7], %s205
        // Predicated region
        $region37: #{tpu_custom_call.1} parent=27 // pred_check
          %p207 = pneg %p92
        $region38: #{tpu_custom_call.1} parent=27 // pred_check_branch
          %209 = sbr.rel (%p207) target = $region40
        $region39: #{tpu_custom_call.1} parent=27 // pred_region
          %s211 = ssub.s32 128, 128
          %212 = vsyncadd %s203, %s211
          %s213 = smul.addr %s22, 128
          %s214 = scalar_lea.hbm %s2, %s213
          %s216 = sshll.u32 %s206, 4
          %s217 = int_to_ptr.vmem [resolvable:$true] %s216
          %219 = dma.vmem_to_hbm [thread:$0]  %s217, 128, %s214, %s203
        $region40: #{tpu_custom_call.1} parent=27 // pred_fallthru
          _
      $region28: #{tpu_custom_call.1} parent=5 // pred_fallthru
        _
      %p220 = scmp.le.s32.totalorder 2, %s17
      // Predicated region
      $region41: #{tpu_custom_call.1} parent=5 // pred_check
        %p221 = pneg %p220
      $region42: #{tpu_custom_call.1} parent=5 // pred_check_branch
        %223 = sbr.rel (%p221) target = $region44
      $region43: #{tpu_custom_call.1} parent=5 // pred_region
        %s224 = ssub.s32 %s17, 2
        // Predicated region
        $region45: #{tpu_custom_call.1} parent=43 // pred_check
          %p225 = pneg %p98
        $region46: #{tpu_custom_call.1} parent=43 // pred_check_branch
          %227 = sbr.rel (%p225) target = $region48
        $region47: #{tpu_custom_call.1} parent=43 // pred_region
          %s228 = sand.u32 %s83, 1
          %s229 = scalar_lea.sflag [#allocation4], %s228
          %s230 = sand.u32 %s83, 1
          %s231 = smul.addr %s230, 8
          %s232 = scalar_lea.vmem [#allocation7], %s231
          %233 = dma.done %s229, 128
        $region48: #{tpu_custom_call.1} parent=43 // pred_fallthru
          _
      $region44: #{tpu_custom_call.1} parent=5 // pred_fallthru
        _
    $region6: #{tpu_custom_call.1} parent=1 // loop_footer
      %s21 = sadd.s32 1, %s17
    $region7: #{tpu_custom_call.1} parent=1 // loop_footer_branch
      %16 = sbr.rel target = $region3
    $region8: #{tpu_custom_call.1} parent=1 // loop_exit
      _
    %234 = vsyncpa [#allocation3], 1
    %s235 = scalar_lea.sflag [#allocation3], 1
    %236 = vsyncpa %s235, 1
    %237 = vsyncpa [#allocation6], 1
    %s238 = scalar_lea.sflag [#allocation6], 1
    %239 = vsyncpa %s238, 1
    %240 = vsyncpa [#allocation4], 1
    %s241 = scalar_lea.sflag [#allocation4], 1
    %242 = vsyncpa %s241, 1

</llo_original>
